<compile_context>
chip_gen: v7x
topology: tpu7x:2x2x1
jax: 0.10.0
libtpu: 0.0.40
codegen_flags: <defaults>
</compile_context>

<pallas_src>
import jax
import jax.numpy as jnp
from jax.experimental import pallas as pl
from jax.experimental.pallas import tpu as pltpu

_LANES = 128

# tan(r) minimax polynomial on [-pi/4, pi/4] (Cephes tanf coefficients),
# relative error ~1e-7: tan(r) = r + r^3 * P(r^2).
_T6 = 9.38540185543e-3
_T5 = 3.11992232697e-3
_T4 = 2.44301354525e-2
_T3 = 5.34112807005e-2
_T2 = 1.33387994085e-1
_T1 = 3.33331568548e-1

_TWO_OVER_PI = 0.6366197723675814
# Cody-Waite split of pi/2 (each part has trailing zero mantissa bits in f32,
# so q * part is exact for moderate |q|).
_PIO2_A = 1.5703125
_PIO2_B = 4.837512969970703125e-4
_PIO2_C = 7.549789948768648e-8


def _tan_kernel(x_ref, o_ref):
    """Elementwise tan with one shared range reduction (~25 VALU ops/elem)."""
    x = x_ref[...].astype(jnp.float32)

    # Quadrant: x = q * (pi/2) + r,  r in [-pi/4, pi/4].
    q = jnp.floor(x * _TWO_OVER_PI + 0.5)
    r = x - q * _PIO2_A
    r = r - q * _PIO2_B
    r = r - q * _PIO2_C

    # Single odd polynomial shared by both quadrant branches (no separate
    # sin and cos range reductions / expansions).
    z = r * r
    p = _T6
    p = p * z + _T5
    p = p * z + _T4
    p = p * z + _T3
    p = p * z + _T2
    p = p * z + _T1
    t = r + r * z * p

    # Odd quadrant: tan(x) = -1 / tan(r). Precise (non-approx) reciprocal:
    # accurate well inside the 1e-5 tolerance and NaN-free if tan(r) == 0.
    qi = q.astype(jnp.int32)
    odd = (qi & 1) == 1
    inv = pl.reciprocal(t, approx=False)
    out = jnp.where(odd, -inv, t)

    o_ref[...] = out.astype(o_ref.dtype)


def _block_params():
    """(target_block_bytes, vmem_limit_bytes) picked per TPU generation."""
    try:
        vmem = getattr(pltpu.get_tpu_info(), "vmem_capacity_bytes", 0) or 0
    except Exception:  # conservative fallback if the query is unavailable
        vmem = 0
    if vmem >= (100 << 20):       # v5e / v6e: 128 MiB VMEM per TensorCore
        return 8 << 20, 64 << 20
    return 4 << 20, 32 << 20      # v7x (64 MiB VMEM per TC) / unknown


def pallas_tan(x: jax.Array, *, target_block_bytes=None, vmem_limit_bytes=None):
    """Elementwise tan via a Pallas TPU kernel. Works on arbitrary shapes."""
    orig_shape = x.shape
    dtype = x.dtype
    flat = x.reshape(-1)
    n = flat.shape[0]
    if n == 0:
        return x

    if target_block_bytes is None or vmem_limit_bytes is None:
        tb, vl = _block_params()
        target_block_bytes = target_block_bytes or tb
        vmem_limit_bytes = vmem_limit_bytes or vl

    itemsize = jnp.dtype(dtype).itemsize
    sub = max(8, 32 // max(1, itemsize))  # min 2nd-minor tile: 8 f32 / 16 bf16
    row_elems = sub * _LANES              # aligned unit for the 2-D slab
    n_main = (n // row_elems) * row_elems

    pieces = []
    if n_main:
        rows = n_main // _LANES           # always a multiple of `sub`

        # Large lane-dense blocks (4-8 MiB): amortize per-step overhead while
        # 2 x (in + out) double-buffering stays far below the VMEM limit.
        target_rows = max(sub, (target_block_bytes // (itemsize * _LANES)) // sub * sub)
        tr = min(rows, target_rows)
        # Guarantee >= 2 grid blocks whenever possible so ("parallel",)
        # actually shards work across both v7x TensorCores.
        if rows > sub:
            half_rows = max(sub, (pl.cdiv(rows, 2) // sub) * sub)
            tr = min(tr, half_rows)

        grid = (pl.cdiv(rows, tr),)       # boundary block is masked; no padding

        x2d = (flat if n_main == n else flat[:n_main]).reshape(rows, _LANES)

        out2d = pl.pallas_call(
            _tan_kernel,
            out_shape=jax.ShapeDtypeStruct((rows, _LANES), dtype),
            grid_spec=pltpu.PrefetchScalarGridSpec(
                num_scalar_prefetch=0,
                grid=grid,
                in_specs=[pl.BlockSpec((tr, _LANES), lambda i: (i, 0))],
                out_specs=pl.BlockSpec((tr, _LANES), lambda i: (i, 0)),
            ),
            compiler_params=pltpu.CompilerParams(
                dimension_semantics=("parallel",),
                vmem_limit_bytes=vmem_limit_bytes,
                # Let the prefix slice / reshape fuse into the pallas_call
                # instead of materializing a second HBM copy of the input.
                allow_input_fusion=[True],
            ),
        )(x2d)
        pieces.append(out2d.reshape(-1))

    if n_main < n:
        # Ragged tail (< row_elems elements): negligible compute; the
        # concatenate costs one extra HBM pass over the output for ragged
        # flat sizes only (documented per review; aligned sizes skip this).
        pieces.append(jnp.tan(flat[n_main:]))

    out = pieces[0] if len(pieces) == 1 else jnp.concatenate(pieces)
    return out.reshape(orig_shape)


if __name__ == "__main__":
    key = jax.random.PRNGKey(0)
    # NCHW input, restricted to (-pi/2, pi/2) like the QAT contract expects.
    x = jax.random.uniform(
        key, (2, 4, 16, 16), dtype=jnp.float32, minval=-1.4, maxval=1.4
    )

    y = pallas_tan(x)
    jax.block_until_ready(y)

    ref = jnp.tan(x)
    assert y.shape == x.shape and y.dtype == x.dtype
    assert jnp.allclose(y, ref, rtol=1e-5, atol=1e-5), "mismatch vs jnp.tan"

    print("KERNEL_OK")
</pallas_src>

<mosaic_0001>
module attributes {stable_mosaic.version = 11 : i64} {
  func.func @_tan_kernel(%arg0: i32, %arg1: memref<8x128xf32, #tpu.memory_space<vmem>>, %arg2: memref<8x128xf32, #tpu.memory_space<vmem>>) attributes {dimension_semantics = [#tpu.dimension_semantics<parallel>], iteration_bounds = array<i64: 2>, scalar_prefetch = 0 : i64, scratch_operands = 0 : i64, tpu.core_type = #tpu.core_type<tc>, window_params = [{transform_indices = @transform_0, window_bounds = array<i64: 8, 128>}, {transform_indices = @transform_1, window_bounds = array<i64: 8, 128>}]} {
    %c0 = arith.constant 0 : index
    %c0_0 = arith.constant 0 : index
    %0 = vector.load %arg1[%c0, %c0_0] : memref<8x128xf32, #tpu.memory_space<vmem>>, vector<8x128xf32>
    %cst = arith.constant 0.636619746 : f32
    %1 = vector.broadcast %cst : f32 to vector<8x128xf32>
    %2 = arith.mulf %0, %1 : vector<8x128xf32>
    %cst_1 = arith.constant 5.000000e-01 : f32
    %3 = vector.broadcast %cst_1 : f32 to vector<8x128xf32>
    %4 = arith.addf %2, %3 : vector<8x128xf32>
    %5 = math.floor %4 : vector<8x128xf32>
    %cst_2 = arith.constant 1.5703125 : f32
    %6 = vector.broadcast %cst_2 : f32 to vector<8x128xf32>
    %7 = arith.mulf %5, %6 : vector<8x128xf32>
    %8 = arith.subf %0, %7 : vector<8x128xf32>
    %cst_3 = arith.constant 4.83751297E-4 : f32
    %9 = vector.broadcast %cst_3 : f32 to vector<8x128xf32>
    %10 = arith.mulf %5, %9 : vector<8x128xf32>
    %11 = arith.subf %8, %10 : vector<8x128xf32>
    %cst_4 = arith.constant 7.549790e-08 : f32
    %12 = vector.broadcast %cst_4 : f32 to vector<8x128xf32>
    %13 = arith.mulf %5, %12 : vector<8x128xf32>
    %14 = arith.subf %11, %13 : vector<8x128xf32>
    %15 = arith.mulf %14, %14 : vector<8x128xf32>
    %cst_5 = arith.constant 0.00938540231 : f32
    %16 = vector.broadcast %cst_5 : f32 to vector<8x128xf32>
    %17 = arith.mulf %16, %15 : vector<8x128xf32>
    %cst_6 = arith.constant 0.00311992224 : f32
    %18 = vector.broadcast %cst_6 : f32 to vector<8x128xf32>
    %19 = arith.addf %17, %18 : vector<8x128xf32>
    %20 = arith.mulf %19, %15 : vector<8x128xf32>
    %cst_7 = arith.constant 0.0244301353 : f32
    %21 = vector.broadcast %cst_7 : f32 to vector<8x128xf32>
    %22 = arith.addf %20, %21 : vector<8x128xf32>
    %23 = arith.mulf %22, %15 : vector<8x128xf32>
    %cst_8 = arith.constant 0.0534112789 : f32
    %24 = vector.broadcast %cst_8 : f32 to vector<8x128xf32>
    %25 = arith.addf %23, %24 : vector<8x128xf32>
    %26 = arith.mulf %25, %15 : vector<8x128xf32>
    %cst_9 = arith.constant 1.333880e-01 : f32
    %27 = vector.broadcast %cst_9 : f32 to vector<8x128xf32>
    %28 = arith.addf %26, %27 : vector<8x128xf32>
    %29 = arith.mulf %28, %15 : vector<8x128xf32>
    %cst_10 = arith.constant 0.333331555 : f32
    %30 = vector.broadcast %cst_10 : f32 to vector<8x128xf32>
    %31 = arith.addf %29, %30 : vector<8x128xf32>
    %32 = arith.mulf %14, %15 : vector<8x128xf32>
    %33 = arith.mulf %32, %31 : vector<8x128xf32>
    %34 = arith.addf %14, %33 : vector<8x128xf32>
    %35 = arith.fptosi %5 : vector<8x128xf32> to vector<8x128xi32>
    %c1_i32 = arith.constant 1 : i32
    %36 = vector.broadcast %c1_i32 : i32 to vector<8x128xi32>
    %37 = arith.andi %35, %36 : vector<8x128xi32>
    %c1_i32_11 = arith.constant 1 : i32
    %38 = vector.broadcast %c1_i32_11 : i32 to vector<8x128xi32>
    %39 = arith.cmpi eq, %37, %38 : vector<8x128xi32>
    %40 = tpu.reciprocal %34 : vector<8x128xf32> -> vector<8x128xf32>
    %cst_12 = arith.constant 0.000000e+00 : f32
    %41 = vector.broadcast %cst_12 : f32 to vector<8x128xf32>
    %42 = arith.subf %41, %40 : vector<8x128xf32>
    %43 = arith.select %39, %42, %34 : vector<8x128xi1>, vector<8x128xf32>
    %c0_13 = arith.constant 0 : index
    %c0_14 = arith.constant 0 : index
    %44 = vector.load %arg2[%c0_13, %c0_14] : memref<8x128xf32, #tpu.memory_space<vmem>>, vector<8x128xf32>
    tpu.vector_store %arg2[%c0_13, %c0_14], %43 {strides = array<i32>} : memref<8x128xf32, #tpu.memory_space<vmem>>, vector<8x128xf32>,
    return
  }
  func.func @transform_0(%arg0: i32) -> (i32, i32) {
    %c0_i32 = arith.constant 0 : i32
    %c0_i32_0 = arith.constant 0 : i32
    return %arg0, %c0_i32 : i32, i32
  }
  func.func @transform_1(%arg0: i32) -> (i32, i32) {
    %c0_i32 = arith.constant 0 : i32
    %c0_i32_0 = arith.constant 0 : i32
    return %arg0, %c0_i32 : i32, i32
  }
}

</mosaic_0001>

<llo_original>
// kernel: tpu_custom_call.1
$region0: #{tpu_custom_call.1}
  #allocation0 [shape = 'u32[]', space=smem, size = 0x4, offset = 0x4, fixed_abs, tag = 'smem constant byte address 0x4 - core index']
  #allocation1 [shape = 'u32[144,128]{1,0:T(1,128)}', space=vmem, size = 0x12000, scoped, tag = 'internal scratch']
  %s0 = inlined_call_operand.hbm [shape: f32[16,128], index: 0, kind: input, shape index: {}]
  %s1 = inlined_call_operand.hbm [shape: f32[16,128], index: 1, kind: output, shape index: {}]
  %s2 = sld [smem:[#allocation0]]
  $region41: #{tpu_custom_call.1} parent=0
    _
  %s4 = ssub.s32 1, %s2
  %s5 = scalar_select 0, %s4, %s2
  $region1: #{tpu_custom_call.1} parent=0
    #allocation2 [shape = 'u8[8192]{0}', space=vmem, size = 0x2000, scoped, tag = 'input window, operand 0']
    #allocation3 [shape = 's32[2]{0}', space=sflag, size = 0x8, scoped, tag = 'scoped memory for tpu_custom_call.1']
    #allocation4 [shape = 's32[2]{0}', space=sflag, size = 0x8, scoped, tag = 'scoped memory for tpu_custom_call.1']
    #allocation5 [shape = 'u8[8192]{0}', space=vmem, size = 0x2000, scoped, tag = 'output window, operand 0']
    %6 = vsyncpa [#allocation3], 0
    %s7 = scalar_lea.sflag [#allocation3], 1
    %8 = vsyncpa %s7, 0
    %9 = vsyncpa [#allocation4], 0
    %s10 = scalar_lea.sflag [#allocation4], 1
    %11 = vsyncpa %s10, 0
    loop: start=0, step=1, limit=4
    $region2: #{tpu_custom_call.1} parent=1 // loop_pre_header
      _
    $region3: #{tpu_custom_call.1} parent=1 // loop_header
      %s13 = sphi 0, %s17
      %p14 = scmp.ge.s32.totalorder %s13, 4
      %s23 = sphi 0, %s25
      %s26 = sphi 0, %s23
      %s27 = sphi 0, %s26
      %s43 = sphi 0, %s27
      %s49 = sphi 0, %s51
      %s52 = sphi 0, %s49
      %s53 = sphi 0, %s52
      %s69 = sphi 0, %s53
    $region4: #{tpu_custom_call.1} parent=1 // loop_header_branch
      %16 = sbr.rel (%p14) target = $region8
    $region5: #{tpu_custom_call.1} parent=1 // loop_body
      %s18 = ssub.s32 %s13, 1
      %s19 = ssub.s32 %s13, 2
      %s20 = sadd.s32 %s13, 1
      %s21 = ssub.s32 %s13, %s20
      %p22 = scmp.eq.s32.totalorder %s21, 0
      %s24 = sadd.s32 %s23, 1
      %s25 = scalar_select %p22, %s23, %s24
      %p28 = pneg %p22
      %p29 = scmp.eq.s32.totalorder %s13, 1
      %p30 = por %p28, %p29
      %p31 = scmp.ne.s32.totalorder %s23, %s26
      %p32 = scmp.eq.s32.totalorder %s13, 0
      %p33 = por %p31, %p32
      %p34 = scmp.ne.s32.totalorder %s23, %s26
      %p35 = scmp.eq.s32.totalorder %s18, 1
      %p36 = por %p34, %p35
      %p37 = scmp.ne.s32.totalorder %s26, %s27
      %p38 = scmp.eq.s32.totalorder %s18, 0
      %p39 = por %p37, %p38
      %p40 = scmp.ne.s32.totalorder %s26, %s27
      %p41 = scmp.eq.s32.totalorder %s19, 1
      %p42 = por %p40, %p41
      %p44 = scmp.ne.s32.totalorder %s27, %s43
      %p45 = scmp.eq.s32.totalorder %s19, 0
      %p46 = por %p44, %p45
      %s47 = ssub.s32 %s13, %s20
      %p48 = scmp.eq.s32.totalorder %s47, 0
      %s50 = sadd.s32 %s49, 1
      %s51 = scalar_select %p48, %s49, %s50
      %p54 = pneg %p48
      %p55 = scmp.eq.s32.totalorder %s13, 1
      %p56 = por %p54, %p55
      %p57 = scmp.ne.s32.totalorder %s49, %s52
      %p58 = scmp.eq.s32.totalorder %s13, 0
      %p59 = por %p57, %p58
      %p60 = scmp.ne.s32.totalorder %s49, %s52
      %p61 = scmp.eq.s32.totalorder %s18, 1
      %p62 = por %p60, %p61
      %p63 = scmp.ne.s32.totalorder %s52, %s53
      %p64 = scmp.eq.s32.totalorder %s18, 0
      %p65 = por %p63, %p64
      %p66 = scmp.ne.s32.totalorder %s52, %s53
      %p67 = scmp.eq.s32.totalorder %s19, 1
      %p68 = por %p66, %p67
      %p70 = scmp.ne.s32.totalorder %s53, %s69
      %p71 = scmp.eq.s32.totalorder %s19, 0
      %p72 = por %p70, %p71
      %p73 = scmp.le.s32.totalorder 1, %s13
      %p74 = scmp.lt.s32.totalorder %s13, 3
      %p75 = pnand %p73, %p74
      %p76 = pneg %p75
      // Predicated region
      $region9: #{tpu_custom_call.1} parent=5 // pred_check
        _
      $region10: #{tpu_custom_call.1} parent=5 // pred_check_branch
        %78 = sbr.rel (%p75) target = $region12
      $region11: #{tpu_custom_call.1} parent=5 // pred_region
        %s79 = ssub.s32 %s13, 1
      $region12: #{tpu_custom_call.1} parent=5 // pred_fallthru
        _
      %p80 = scmp.lt.s32.totalorder %s13, 2
      // Predicated region
      $region13: #{tpu_custom_call.1} parent=5 // pred_check
        %p81 = pneg %p80
      $region14: #{tpu_custom_call.1} parent=5 // pred_check_branch
        %83 = sbr.rel (%p81) target = $region16
      $region15: #{tpu_custom_call.1} parent=5 // pred_region
        // Predicated region
        $region17: #{tpu_custom_call.1} parent=15 // pred_check
          %p84 = pneg %p33
        $region18: #{tpu_custom_call.1} parent=15 // pred_check_branch
          %86 = sbr.rel (%p84) target = $region20
        $region19: #{tpu_custom_call.1} parent=15 // pred_region
          %s87 = sand.u32 %s23, 1
          %s88 = scalar_lea.sflag [#allocation3], %s87
          %s89 = sand.u32 %s23, 1
          %s90 = smul.addr %s89, 8
          %s91 = scalar_lea.vmem [#allocation2], %s90
          %s93 = ssub.s32 128, 128
          %94 = vsyncadd %s88, %s93
          %s95 = smul.addr %s13, 128
          %s96 = scalar_lea.hbm %s0, %s95
          %s98 = sshll.u32 %s91, 4
          %s99 = int_to_ptr.vmem [resolvable:$true] %s98
          %101 = dma.hbm_to_vmem [thread:$0]  %s96, 128, %s99, %s88
        $region20: #{tpu_custom_call.1} parent=15 // pred_fallthru
          _
      $region16: #{tpu_custom_call.1} parent=5 // pred_fallthru
        _
      %p102 = scmp.le.s32.totalorder 1, %s13
      %p103 = scmp.lt.s32.totalorder %s13, 3
      %p104 = pnand %p102, %p103
      %p105 = pneg %p104
      // Predicated region
      $region21: #{tpu_custom_call.1} parent=5 // pred_check
        _
      $region22: #{tpu_custom_call.1} parent=5 // pred_check_branch
        %107 = sbr.rel (%p104) target = $region24
      $region23: #{tpu_custom_call.1} parent=5 // pred_region
        %s108 = ssub.s32 %s13, 1
        %s109 = sand.u32 %s26, 1
        %s110 = scalar_lea.sflag [#allocation3], %s109
        %s111 = sand.u32 %s26, 1
        %s112 = smul.addr %s111, 8
        %s113 = scalar_lea.vmem [#allocation2], %s112
        // Predicated region
        $region25: #{tpu_custom_call.1} parent=23 // pred_check
          %p114 = pneg %p39
        $region26: #{tpu_custom_call.1} parent=23 // pred_check_branch
          %116 = sbr.rel (%p114) target = $region28
        $region27: #{tpu_custom_call.1} parent=23 // pred_region
          %117 = dma.done %s110, 128
        $region28: #{tpu_custom_call.1} parent=23 // pred_fallthru
          _
        %s118 = sand.u32 %s26, 1
        %s119 = scalar_lea.sflag [#allocation3], %s118
        %s120 = sand.u32 %s26, 1
        %s121 = smul.addr %s120, 8
        %s122 = scalar_lea.vmem [#allocation2], %s121
        %p123 = pneg %p39
        %p124 = pneg %p36
        %p125 = pneg %p65
        %p126 = pneg %p62
        %s127 = sand.u32 %s52, 1
        %s128 = scalar_lea.sflag [#allocation4], %s127
        %s129 = sand.u32 %s52, 1
        %s130 = smul.addr %s129, 8
        %s131 = scalar_lea.vmem [#allocation5], %s130
        %v132 = vld [vmem:[%s113] sm:$0xff]
        %v133 = vmul.f32 %v132, 0.63661975
        %v134 = vadd.f32 %v133, 0.5
        %v135 = vfloor.f32 %v134
        %v136 = vmul.f32 %v135, 1.5703125
        %v137 = vsub.f32 %v132, %v136
        %v138 = vmul.f32 %v135, 0.0004837513
        %v139 = vsub.f32 %v137, %v138
        %v140 = vmul.f32 %v135, 7.54979e-08
        %v141 = vsub.f32 %v139, %v140
        %v142 = vmul.f32 %v141, %v141
        %v143 = vmul.f32 %v142, 0.009385402
        %v144 = vadd.f32 %v143, 0.0031199222
        %v145 = vmul.f32 %v144, %v142
        %v146 = vadd.f32 %v145, 0.024430135
        %v147 = vmul.f32 %v146, %v142
        %v148 = vadd.f32 %v147, 0.05341128
        %v149 = vmul.f32 %v148, %v142
        %v150 = vadd.f32 %v149, 0.133388
        %v151 = vmul.f32 %v150, %v142
        %v152 = vadd.f32 %v151, 0.33333156
        %v153 = vmul.f32 %v141, %v142
        %v154 = vmul.f32 %v153, %v152
        %v155 = vadd.f32 %v141, %v154
        %v156 = vcvt.f32.s32.to.zero.pseudo %v135
        %v157 = vand.u32 %v156, 1
        %vm158 = vcmp.eq.s32.totalorder %v157, 1
        %v159 = vrcp.pop %v155
        %v160 = vsub.f32 0.0, %v159
        %v161 = vsel %vm158, %v160, %v155
        %162 = vst [vmem:[%s131] sm:$0xff] %v161
        %s163 = sand.u32 %s52, 1
        %s164 = scalar_lea.sflag [#allocation4], %s163
        %s165 = sand.u32 %s52, 1
        %s166 = smul.addr %s165, 8
        %s167 = scalar_lea.vmem [#allocation5], %s166
        // Predicated region
        $region29: #{tpu_custom_call.1} parent=23 // pred_check
          %p168 = pneg %p62
        $region30: #{tpu_custom_call.1} parent=23 // pred_check_branch
          %170 = sbr.rel (%p168) target = $region32
        $region31: #{tpu_custom_call.1} parent=23 // pred_region
          %s172 = ssub.s32 128, 128
          %173 = vsyncadd %s164, %s172
          %s174 = smul.addr %s18, 128
          %s175 = scalar_lea.hbm %s1, %s174
          %s177 = sshll.u32 %s167, 4
          %s178 = int_to_ptr.vmem [resolvable:$true] %s177
          %180 = dma.vmem_to_hbm [thread:$0]  %s178, 128, %s175, %s164
        $region32: #{tpu_custom_call.1} parent=23 // pred_fallthru
          _
      $region24: #{tpu_custom_call.1} parent=5 // pred_fallthru
        _
      %p181 = scmp.le.s32.totalorder 2, %s13
      // Predicated region
      $region33: #{tpu_custom_call.1} parent=5 // pred_check
        %p182 = pneg %p181
      $region34: #{tpu_custom_call.1} parent=5 // pred_check_branch
        %184 = sbr.rel (%p182) target = $region36
      $region35: #{tpu_custom_call.1} parent=5 // pred_region
        %s185 = ssub.s32 %s13, 2
        // Predicated region
        $region37: #{tpu_custom_call.1} parent=35 // pred_check
          %p186 = pneg %p68
        $region38: #{tpu_custom_call.1} parent=35 // pred_check_branch
          %188 = sbr.rel (%p186) target = $region40
        $region39: #{tpu_custom_call.1} parent=35 // pred_region
          %s189 = sand.u32 %s53, 1
          %s190 = scalar_lea.sflag [#allocation4], %s189
          %s191 = sand.u32 %s53, 1
          %s192 = smul.addr %s191, 8
          %s193 = scalar_lea.vmem [#allocation5], %s192
          %194 = dma.done %s190, 128
        $region40: #{tpu_custom_call.1} parent=35 // pred_fallthru
          _
      $region36: #{tpu_custom_call.1} parent=5 // pred_fallthru
        _
    $region6: #{tpu_custom_call.1} parent=1 // loop_footer
      %s17 = sadd.s32 1, %s13
    $region7: #{tpu_custom_call.1} parent=1 // loop_footer_branch
      %12 = sbr.rel target = $region3
    $region8: #{tpu_custom_call.1} parent=1 // loop_exit
      _
    %195 = vsyncpa [#allocation3], 1
    %s196 = scalar_lea.sflag [#allocation3], 1
    %197 = vsyncpa %s196, 1
    %198 = vsyncpa [#allocation4], 1
    %s199 = scalar_lea.sflag [#allocation4], 1
    %200 = vsyncpa %s199, 1

</llo_original>
